<compile_context>
chip_gen: v6e
topology: v6e:2x2x1
jax: 0.10.0
libtpu: 0.0.40
codegen_flags: <defaults>
</compile_context>

<pallas_src>
import jax
import jax.numpy as jnp
from jax.experimental import pallas as pl
from jax.experimental.pallas import tpu as pltpu


def _round_up(n, m):
    return ((n + m - 1) // m) * m


def _pad_feature(d):
    # 256-align larger dims for the v6e/v7x 256x256 MXU; 128-align small ones
    # (lane-dense, matches the v5e 128x128 MXU, avoids wasted work on toy dims).
    return _round_up(d, 256 if d >= 256 else 128)


def _mlp_kernel(x_ref, w1_ref, b1_ref, w2_ref, b2_ref, w3_ref, b3_ref, o_ref):
    # fc1 + ReLU: bf16 MXU operands, f32 accumulation; bias/ReLU in f32 (VPU).
    h = jnp.dot(x_ref[...], w1_ref[...], preferred_element_type=jnp.float32)
    h = jnp.maximum(h + b1_ref[...], 0.0)
    # fc2 + ReLU
    h = jnp.dot(h.astype(w2_ref.dtype), w2_ref[...],
                preferred_element_type=jnp.float32)
    h = jnp.maximum(h + b2_ref[...], 0.0)
    # fc3 (no activation)
    h = jnp.dot(h.astype(w3_ref.dtype), w3_ref[...],
                preferred_element_type=jnp.float32)
    o_ref[...] = (h + b3_ref[...]).astype(o_ref.dtype)


def init_params(key, input_dim, hidden_dim, output_dim):
    """Deterministic synthetic params matching nn.Linear shapes, stored
    transposed as (in_features, out_features)."""
    ks = jax.random.split(key, 6)
    scale = 0.1
    return {
        "w1": scale * jax.random.normal(ks[0], (input_dim, hidden_dim), jnp.float32),
        "b1": scale * jax.random.normal(ks[1], (1, hidden_dim), jnp.float32),
        "w2": scale * jax.random.normal(ks[2], (hidden_dim, hidden_dim), jnp.float32),
        "b2": scale * jax.random.normal(ks[3], (1, hidden_dim), jnp.float32),
        "w3": scale * jax.random.normal(ks[4], (hidden_dim, output_dim), jnp.float32),
        "b3": scale * jax.random.normal(ks[5], (1, output_dim), jnp.float32),
    }


def prepare_params(params):
    """One-time padding + bf16 cast of the weights (hoisted out of the per-call
    path). Returns (prepared_param_dict, output_dim)."""
    w1, b1, w2, b2, w3, b3 = (params["w1"], params["b1"], params["w2"],
                              params["b2"], params["w3"], params["b3"])
    in_dim, hid_dim = w1.shape
    out_dim = w3.shape[1]
    hid_p = _pad_feature(hid_dim)
    out_p = _pad_feature(out_dim)
    bf16, f32 = jnp.bfloat16, jnp.float32
    prepared = {
        # K (= in_dim) is left unpadded so x never needs a lane pad per call.
        "w1": jnp.pad(w1, ((0, 0), (0, hid_p - hid_dim))).astype(bf16),
        "b1": jnp.pad(b1.reshape(1, -1), ((0, 0), (0, hid_p - hid_dim))).astype(f32),
        "w2": jnp.pad(w2, ((0, hid_p - hid_dim), (0, hid_p - hid_dim))).astype(bf16),
        "b2": jnp.pad(b2.reshape(1, -1), ((0, 0), (0, hid_p - hid_dim))).astype(f32),
        "w3": jnp.pad(w3, ((0, hid_p - hid_dim), (0, out_p - out_dim))).astype(bf16),
        "b3": jnp.pad(b3.reshape(1, -1), ((0, 0), (0, out_p - out_dim))).astype(f32),
    }
    return prepared, int(out_dim)


def _choose_batch_tile(B, tm_max):
    """Largest sublane-aligned batch tile with <= ~12.5% padding waste; if that
    leaves a single-step grid, split once so the parallel batch axis can use
    both v7x TensorCores."""
    b_p8 = _round_up(B, 8)
    tm = min(_round_up(tm_max, 8), b_p8)
    while tm > 8:
        waste = _round_up(b_p8, tm) - b_p8
        if waste * 8 <= b_p8:
            break
        tm -= 8
    b_p = _round_up(b_p8, tm)
    if b_p // tm == 1 and b_p >= 16 and (b_p // 2) % 8 == 0:
        tm = b_p // 2
    return tm, b_p


def action_decoder_forward(x, prepared, out_dim, *, tm=512, out_dtype=jnp.float32):
    """x: (B, input_dim) f32. prepared: output of prepare_params()."""
    w1p, b1p = prepared["w1"], prepared["b1"]
    w2p, b2p = prepared["w2"], prepared["b2"]
    w3p, b3p = prepared["w3"], prepared["b3"]

    B, in_dim = x.shape
    assert in_dim == w1p.shape[0], "x feature dim must match fc1 in_features"
    hid_p = w1p.shape[1]
    out_p = w3p.shape[1]

    tm, b_p = _choose_batch_tile(B, tm)
    grid = (b_p // tm,)

    # Per-call input prep: optional batch pad + single bf16 cast. Feature axis
    # is untouched (block dim == full array dim is legal for BlockSpec).
    xp = x if b_p == B else jnp.pad(x, ((0, b_p - B), (0, 0)))
    xp = xp.astype(jnp.bfloat16)

    weight_args = (w1p, b1p, w2p, b2p, w3p, b3p)
    weight_bytes = sum(int(a.size) * a.dtype.itemsize for a in weight_args)
    out_itemsize = jnp.dtype(out_dtype).itemsize

    # VMEM budget from the actual footprint: single-buffered weights,
    # double-buffered x/out tiles, ~two live f32 hidden activations, + slack.
    footprint = (weight_bytes
                 + 2 * tm * in_dim * 2
                 + 2 * tm * out_p * out_itemsize
                 + 2 * tm * hid_p * 4)
    vmem_limit = int(min(max(2 * footprint + (2 << 20), 8 << 20), 64 << 20))

    flops = 2 * b_p * (in_dim * hid_p + hid_p * hid_p + hid_p * out_p)
    bytes_accessed = int(b_p * in_dim * 2 + weight_bytes
                         + b_p * out_p * out_itemsize)

    # Weights/biases: constant index_map -> resident in VMEM across grid steps;
    # one buffer is enough (pipelining them buys nothing), halving their VMEM use.
    def resident(shape):
        return pl.BlockSpec(shape, lambda i: (0, 0),
                            pipeline_mode=pl.Buffered(1))

    out_padded = pl.pallas_call(
        _mlp_kernel,
        out_shape=jax.ShapeDtypeStruct((b_p, out_p), out_dtype),
        grid=grid,
        in_specs=[
            pl.BlockSpec((tm, in_dim), lambda i: (i, 0)),
            resident(w1p.shape), resident(b1p.shape),
            resident(w2p.shape), resident(b2p.shape),
            resident(w3p.shape), resident(b3p.shape),
        ],
        out_specs=pl.BlockSpec((tm, out_p), lambda i: (i, 0)),
        compiler_params=pltpu.CompilerParams(
            dimension_semantics=("parallel",),
            vmem_limit_bytes=vmem_limit,
        ),
        cost_estimate=pl.CostEstimate(
            flops=flops, transcendentals=0, bytes_accessed=bytes_accessed),
    )(xp, *weight_args)

    # Strip batch / lane padding only when present.
    if b_p != B or out_p != out_dim:
        out_padded = out_padded[:B, :out_dim]
    return out_padded


def _reference_forward_bf16(x, p):
    """Pure-JAX reference with the same bf16-operand / f32-accumulate math."""
    bf16 = jnp.bfloat16
    h = jnp.dot(x.astype(bf16), p["w1"].astype(bf16),
                preferred_element_type=jnp.float32) + p["b1"]
    h = jnp.maximum(h, 0.0)
    h = jnp.dot(h.astype(bf16), p["w2"].astype(bf16),
                preferred_element_type=jnp.float32) + p["b2"]
    h = jnp.maximum(h, 0.0)
    return jnp.dot(h.astype(bf16), p["w3"].astype(bf16),
                   preferred_element_type=jnp.float32) + p["b3"]


def _reference_forward_f32(x, p):
    h = jnp.maximum(x @ p["w1"] + p["b1"], 0.0)
    h = jnp.maximum(h @ p["w2"] + p["b2"], 0.0)
    return h @ p["w3"] + p["b3"]


if __name__ == "__main__":
    key = jax.random.PRNGKey(0)
    k_x, k_p = jax.random.split(key)

    batch, input_dim, hidden_dim, output_dim = 8, 32, 64, 16
    x = jax.random.normal(k_x, (batch, input_dim), jnp.float32)
    params = init_params(k_p, input_dim, hidden_dim, output_dim)

    # One-time parameter preparation (padding + bf16 cast), outside the hot path.
    prepared, out_dim = prepare_params(params)
    prepared = jax.block_until_ready(prepared)

    fwd = jax.jit(action_decoder_forward,
                  static_argnames=("out_dim", "tm", "out_dtype"))
    out = jax.block_until_ready(fwd(x, prepared, out_dim=out_dim))

    assert out.shape == (batch, output_dim)

    # Tight check vs a reference using identical bf16-operand math.
    ref_bf16 = _reference_forward_bf16(x, params)
    assert jnp.allclose(out, ref_bf16, atol=2e-3, rtol=2e-3), \
        "mismatch vs bf16-matched reference"

    # Looser sanity check vs full-f32 math (bf16 operands intentionally differ).
    ref_f32 = _reference_forward_f32(x, params)
    assert jnp.allclose(out, ref_f32, atol=5e-2, rtol=5e-2), \
        "mismatch vs f32 reference"

    print("KERNEL_OK")
</pallas_src>

<mosaic_0001>
module attributes {stable_mosaic.version = 11 : i64} {
  func.func @_mlp_kernel(%arg0: i32, %arg1: memref<8x32xbf16, #tpu.memory_space<vmem>>, %arg2: memref<32x128xbf16, #tpu.memory_space<vmem>>, %arg3: memref<1x128xf32, #tpu.memory_space<vmem>>, %arg4: memref<128x128xbf16, #tpu.memory_space<vmem>>, %arg5: memref<1x128xf32, #tpu.memory_space<vmem>>, %arg6: memref<128x128xbf16, #tpu.memory_space<vmem>>, %arg7: memref<1x128xf32, #tpu.memory_space<vmem>>, %arg8: memref<8x128xf32, #tpu.memory_space<vmem>>) attributes {dimension_semantics = [#tpu.dimension_semantics<parallel>], iteration_bounds = array<i64: 1>, scalar_prefetch = 0 : i64, scratch_operands = 0 : i64, tpu.core_type = #tpu.core_type<tc>, window_params = [{transform_indices = @transform_0, window_bounds = array<i64: 8, 32>}, {pipeline_mode = #tpu.pipeline_mode<synchronous>, transform_indices = @transform_1, window_bounds = array<i64: 32, 128>}, {pipeline_mode = #tpu.pipeline_mode<synchronous>, transform_indices = @transform_2, window_bounds = array<i64: 1, 128>}, {pipeline_mode = #tpu.pipeline_mode<synchronous>, transform_indices = @transform_3, window_bounds = array<i64: 128, 128>}, {pipeline_mode = #tpu.pipeline_mode<synchronous>, transform_indices = @transform_4, window_bounds = array<i64: 1, 128>}, {pipeline_mode = #tpu.pipeline_mode<synchronous>, transform_indices = @transform_5, window_bounds = array<i64: 128, 128>}, {pipeline_mode = #tpu.pipeline_mode<synchronous>, transform_indices = @transform_6, window_bounds = array<i64: 1, 128>}, {transform_indices = @transform_7, window_bounds = array<i64: 8, 128>}]} {
    %c0 = arith.constant 0 : index
    %c0_0 = arith.constant 0 : index
    %0 = vector.load %arg1[%c0, %c0_0] : memref<8x32xbf16, #tpu.memory_space<vmem>>, vector<8x32xbf16>
    %c0_1 = arith.constant 0 : index
    %c0_2 = arith.constant 0 : index
    %1 = vector.load %arg2[%c0_1, %c0_2] : memref<32x128xbf16, #tpu.memory_space<vmem>>, vector<32x128xbf16>
    %cst = arith.constant dense<0.000000e+00> : vector<8x128xf32>
    %2 = tpu.matmul %0, %1, %cst {dimension_numbers = #tpu.dot_dimension_numbers<[1], [0], [0], [1], [0, 0, 1, 1], [], []>} : vector<8x32xbf16>, vector<32x128xbf16>, vector<8x128xf32> -> vector<8x128xf32>
    %c0_3 = arith.constant 0 : index
    %c0_4 = arith.constant 0 : index
    %3 = vector.load %arg3[%c0_3, %c0_4] : memref<1x128xf32, #tpu.memory_space<vmem>>, vector<1x128xf32>
    %4 = vector.broadcast %3 : vector<1x128xf32> to vector<8x128xf32>
    %5 = arith.addf %2, %4 : vector<8x128xf32>
    %cst_5 = arith.constant 0.000000e+00 : f32
    %6 = vector.broadcast %cst_5 : f32 to vector<8x128xf32>
    %7 = arith.maximumf %5, %6 : vector<8x128xf32>
    %8 = arith.truncf %7 : vector<8x128xf32> to vector<8x128xbf16>
    %c0_6 = arith.constant 0 : index
    %c0_7 = arith.constant 0 : index
    %9 = vector.load %arg4[%c0_6, %c0_7] : memref<128x128xbf16, #tpu.memory_space<vmem>>, vector<128x128xbf16>
    %cst_8 = arith.constant dense<0.000000e+00> : vector<8x128xf32>
    %10 = tpu.matmul %8, %9, %cst_8 {dimension_numbers = #tpu.dot_dimension_numbers<[1], [0], [0], [1], [0, 0, 1, 1], [], []>} : vector<8x128xbf16>, vector<128x128xbf16>, vector<8x128xf32> -> vector<8x128xf32>
    %c0_9 = arith.constant 0 : index
    %c0_10 = arith.constant 0 : index
    %11 = vector.load %arg5[%c0_9, %c0_10] : memref<1x128xf32, #tpu.memory_space<vmem>>, vector<1x128xf32>
    %12 = vector.broadcast %11 : vector<1x128xf32> to vector<8x128xf32>
    %13 = arith.addf %10, %12 : vector<8x128xf32>
    %cst_11 = arith.constant 0.000000e+00 : f32
    %14 = vector.broadcast %cst_11 : f32 to vector<8x128xf32>
    %15 = arith.maximumf %13, %14 : vector<8x128xf32>
    %16 = arith.truncf %15 : vector<8x128xf32> to vector<8x128xbf16>
    %c0_12 = arith.constant 0 : index
    %c0_13 = arith.constant 0 : index
    %17 = vector.load %arg6[%c0_12, %c0_13] : memref<128x128xbf16, #tpu.memory_space<vmem>>, vector<128x128xbf16>
    %cst_14 = arith.constant dense<0.000000e+00> : vector<8x128xf32>
    %18 = tpu.matmul %16, %17, %cst_14 {dimension_numbers = #tpu.dot_dimension_numbers<[1], [0], [0], [1], [0, 0, 1, 1], [], []>} : vector<8x128xbf16>, vector<128x128xbf16>, vector<8x128xf32> -> vector<8x128xf32>
    %c0_15 = arith.constant 0 : index
    %c0_16 = arith.constant 0 : index
    %19 = vector.load %arg7[%c0_15, %c0_16] : memref<1x128xf32, #tpu.memory_space<vmem>>, vector<1x128xf32>
    %20 = vector.broadcast %19 : vector<1x128xf32> to vector<8x128xf32>
    %21 = arith.addf %18, %20 : vector<8x128xf32>
    %c0_17 = arith.constant 0 : index
    %c0_18 = arith.constant 0 : index
    %22 = vector.load %arg8[%c0_17, %c0_18] : memref<8x128xf32, #tpu.memory_space<vmem>>, vector<8x128xf32>
    tpu.vector_store %arg8[%c0_17, %c0_18], %21 {strides = array<i32>} : memref<8x128xf32, #tpu.memory_space<vmem>>, vector<8x128xf32>,
    return
  }
  func.func @transform_0(%arg0: i32) -> (i32, i32) {
    %c0_i32 = arith.constant 0 : i32
    %c0_i32_0 = arith.constant 0 : i32
    return %arg0, %c0_i32 : i32, i32
  }
  func.func @transform_1(%arg0: i32) -> (i32, i32) {
    %c0_i32 = arith.constant 0 : i32
    %c0_i32_0 = arith.constant 0 : i32
    %c0_i32_1 = arith.constant 0 : i32
    return %c0_i32, %c0_i32_0 : i32, i32
  }
  func.func @transform_2(%arg0: i32) -> (i32, i32) {
    %c0_i32 = arith.constant 0 : i32
    %c0_i32_0 = arith.constant 0 : i32
    %c0_i32_1 = arith.constant 0 : i32
    return %c0_i32, %c0_i32_0 : i32, i32
  }
  func.func @transform_3(%arg0: i32) -> (i32, i32) {
    %c0_i32 = arith.constant 0 : i32
    %c0_i32_0 = arith.constant 0 : i32
    %c0_i32_1 = arith.constant 0 : i32
    return %c0_i32, %c0_i32_0 : i32, i32
  }
  func.func @transform_4(%arg0: i32) -> (i32, i32) {
    %c0_i32 = arith.constant 0 : i32
    %c0_i32_0 = arith.constant 0 : i32
    %c0_i32_1 = arith.constant 0 : i32
    return %c0_i32, %c0_i32_0 : i32, i32
  }
  func.func @transform_5(%arg0: i32) -> (i32, i32) {
    %c0_i32 = arith.constant 0 : i32
    %c0_i32_0 = arith.constant 0 : i32
    %c0_i32_1 = arith.constant 0 : i32
    return %c0_i32, %c0_i32_0 : i32, i32
  }
  func.func @transform_6(%arg0: i32) -> (i32, i32) {
    %c0_i32 = arith.constant 0 : i32
    %c0_i32_0 = arith.constant 0 : i32
    %c0_i32_1 = arith.constant 0 : i32
    return %c0_i32, %c0_i32_0 : i32, i32
  }
  func.func @transform_7(%arg0: i32) -> (i32, i32) {
    %c0_i32 = arith.constant 0 : i32
    %c0_i32_0 = arith.constant 0 : i32
    return %arg0, %c0_i32 : i32, i32
  }
}

</mosaic_0001>

<llo_original>
// kernel: action_decoder_forward.1
$region0: #{action_decoder_forward.1}
  #allocation0 [shape = 'u32[]', space=smem, size = 0x4, offset = 0x4, fixed_abs, tag = 'smem constant byte address 0x4 - core index']
  #allocation1 [shape = 'u32[144,128]{1,0:T(1,128)}', space=vmem, size = 0x12000, scoped, tag = 'internal scratch']
  %s0 = inlined_call_operand.vmem [shape: bf16[8,32], index: 0, kind: input, shape index: {}]
  %s1 = inlined_call_operand.vmem [shape: bf16[32,128], index: 1, kind: input, shape index: {}]
  %s2 = inlined_call_operand.vmem [shape: f32[1,128], index: 2, kind: input, shape index: {}]
  %s3 = inlined_call_operand.hbm [shape: bf16[128,128], index: 3, kind: input, shape index: {}]
  %s4 = inlined_call_operand.vmem [shape: f32[1,128], index: 4, kind: input, shape index: {}]
  %s5 = inlined_call_operand.hbm [shape: bf16[128,128], index: 5, kind: input, shape index: {}]
  %s6 = inlined_call_operand.vmem [shape: f32[1,128], index: 6, kind: input, shape index: {}]
  %s7 = inlined_call_operand.hbm [shape: f32[8,128], index: 7, kind: output, shape index: {}]
  %s8 = sld [smem:[#allocation0]]
  $region46: #{action_decoder_forward.1} parent=0
    _
  %s10 = ssub.s32 1, %s8
  %s11 = scalar_select 0, %s10, %s8
  $region1: #{action_decoder_forward.1} parent=0
    #allocation2 [shape = 'u8[32768]{0}', space=vmem, size = 0x8000, scoped, tag = 'input window, operand 3, single buffered']
    #allocation3 [shape = 's32[1]{0}', space=sflag, size = 0x4, scoped, tag = 'scoped memory for action_decoder_forward.1']
    #allocation4 [shape = 's32[1]{0}', space=sflag, size = 0x4, scoped, tag = 'scoped memory for action_decoder_forward.1']
    #allocation5 [shape = 'u8[32768]{0}', space=vmem, size = 0x8000, scoped, tag = 'input window, operand 5, single buffered']
    #allocation6 [shape = 's32[1]{0}', space=sflag, size = 0x4, scoped, tag = 'scoped memory for action_decoder_forward.1']
    #allocation7 [shape = 'u8[4096]{0}', space=vmem, size = 0x1000, scoped, tag = 'output window, operand 0, single buffered']
    %12 = vsyncpa [#allocation3], 0
    %13 = vsyncpa [#allocation6], 0
    %14 = vsyncpa [#allocation4], 0
    // Predicated region
    $region2: #{action_decoder_forward.1} parent=1 // pred_check
      _
    $region3: #{action_decoder_forward.1} parent=1 // pred_check_branch
      %16 = sbr.rel (0) target = $region5
    $region4: #{action_decoder_forward.1} parent=1 // pred_region
      _
    $region5: #{action_decoder_forward.1} parent=1 // pred_fallthru
      _
    // Predicated region
    $region6: #{action_decoder_forward.1} parent=1 // pred_check
      _
    $region7: #{action_decoder_forward.1} parent=1 // pred_check_branch
      %18 = sbr.rel (0) target = $region9
    $region8: #{action_decoder_forward.1} parent=1 // pred_region
      _
    $region9: #{action_decoder_forward.1} parent=1 // pred_fallthru
      _
    // Predicated region
    $region10: #{action_decoder_forward.1} parent=1 // pred_check
      _
    $region11: #{action_decoder_forward.1} parent=1 // pred_check_branch
      %20 = sbr.rel (0) target = $region13
    $region12: #{action_decoder_forward.1} parent=1 // pred_region
      _
    $region13: #{action_decoder_forward.1} parent=1 // pred_fallthru
      _
    // Predicated region
    $region14: #{action_decoder_forward.1} parent=1 // pred_check
      _
    $region15: #{action_decoder_forward.1} parent=1 // pred_check_branch
      %22 = sbr.rel (0) target = $region17
    $region16: #{action_decoder_forward.1} parent=1 // pred_region
      %s24 = ssub.s32 1024, 1024
      %25 = vsyncadd [#allocation3], %s24
      %s26 = sshll.u32 [#allocation2], 4
      %s27 = int_to_ptr.vmem [resolvable:$true] %s26
      %32 = dma.hbm_to_vmem [thread:$0]  %s3, 1024, %s27, [#allocation3], 64, 64, 4
    $region17: #{action_decoder_forward.1} parent=1 // pred_fallthru
      _
    // Predicated region
    $region18: #{action_decoder_forward.1} parent=1 // pred_check
      _
    $region19: #{action_decoder_forward.1} parent=1 // pred_check_branch
      %34 = sbr.rel (0) target = $region21
    $region20: #{action_decoder_forward.1} parent=1 // pred_region
      _
    $region21: #{action_decoder_forward.1} parent=1 // pred_fallthru
      _
    // Predicated region
    $region22: #{action_decoder_forward.1} parent=1 // pred_check
      _
    $region23: #{action_decoder_forward.1} parent=1 // pred_check_branch
      %36 = sbr.rel (0) target = $region25
    $region24: #{action_decoder_forward.1} parent=1 // pred_region
      %s38 = ssub.s32 1024, 1024
      %39 = vsyncadd [#allocation6], %s38
      %s40 = sshll.u32 [#allocation5], 4
      %s41 = int_to_ptr.vmem [resolvable:$true] %s40
      %46 = dma.hbm_to_vmem [thread:$0]  %s5, 1024, %s41, [#allocation6], 64, 64, 4
    $region25: #{action_decoder_forward.1} parent=1 // pred_fallthru
      _
    // Predicated region
    $region26: #{action_decoder_forward.1} parent=1 // pred_check
      _
    $region27: #{action_decoder_forward.1} parent=1 // pred_check_branch
      %48 = sbr.rel (0) target = $region29
    $region28: #{action_decoder_forward.1} parent=1 // pred_region
      _
    $region29: #{action_decoder_forward.1} parent=1 // pred_fallthru
      _
    // Predicated region
    $region30: #{action_decoder_forward.1} parent=1 // pred_check
      _
    $region31: #{action_decoder_forward.1} parent=1 // pred_check_branch
      %50 = sbr.rel (0) target = $region33
    $region32: #{action_decoder_forward.1} parent=1 // pred_region
      %51 = dma.done [#allocation3], 1024
    $region33: #{action_decoder_forward.1} parent=1 // pred_fallthru
      _
    // Predicated region
    $region34: #{action_decoder_forward.1} parent=1 // pred_check
      _
    $region35: #{action_decoder_forward.1} parent=1 // pred_check_branch
      %53 = sbr.rel (0) target = $region37
    $region36: #{action_decoder_forward.1} parent=1 // pred_region
      %54 = dma.done [#allocation6], 1024
    $region37: #{action_decoder_forward.1} parent=1 // pred_fallthru
      _
    %v56 = vld [vmem:[%s0] sm:$0xf]
    %v57 = vld [vmem:[%s1] sm:$0xf]
    %v58 = vld [vmem:[%s1 + $0x4] sm:$0xf]
    %v59 = vld [vmem:[%s1 + $0x8] sm:$0xf]
    %v60 = vld [vmem:[%s1 + $0xc] sm:$0xf]
    %v61 = vld [vmem:[%s2] sm:$0x1]
    %v63 = vlaneseq
    %v64 = vshrl.u32 %v63, 7
    %v65 = vsub.s32 0, %v64
    %v66 = vrot.slane %v61, %v65
    %v72 = vunpack.c.l.b16 %v57
    %v73 = vunpack.c.l.b16 %v58
    %v74 = vunpack.c.l.b16 %v59
    %v75 = vunpack.c.l.b16 %v60
    %v76 = vpack.c.b16 %v73, %v72
    %v77 = vpack.c.b16 %v75, %v74
    %vm80 = vcmask 261120
    %v82 = vsel %vm80, %v56, 0
    %84 = vmatprep.subr.bf16.mxu0 0
    %85 = vmatpush1.bf16.msra.mxu0 0
    %86 = vmatprep.subr.bf16.mxu0 0
    %87 = vmatpush1.bf16.msra.mxu0 0
    %88 = vmatprep.subr.bf16.mxu0 0
    %89 = vmatpush1.bf16.msra.mxu0 0
    %90 = vmatprep.subr.bf16.mxu0 0
    %91 = vmatpush1.bf16.msra.mxu0 0
    %92 = vmatprep.subr.bf16.mxu0 0
    %93 = vmatpush1.bf16.msra.mxu0 0
    %94 = vmatprep.subr.bf16.mxu0 0
    %95 = vmatpush1.bf16.msra.mxu0 0
    %96 = vmatprep.subr.bf16.mxu0 0
    %97 = vmatpush1.bf16.msra.mxu0 %v77
    %98 = vmatprep.subr.bf16.mxu0 0
    %99 = vmatpush1.bf16.msra.mxu0 %v76
    %100 = vmatprep.subr.bf16.mxu0 0
    %101 = vmatpush2.bf16.msra.mxu0 0
    %102 = vmatprep.subr.bf16.mxu0 0
    %103 = vmatpush2.bf16.msra.mxu0 0
    %104 = vmatprep.subr.bf16.mxu0 0
    %105 = vmatpush2.bf16.msra.mxu0 0
    %106 = vmatprep.subr.bf16.mxu0 0
    %107 = vmatpush2.bf16.msra.mxu0 0
    %108 = vmatprep.subr.bf16.mxu0 0
    %109 = vmatpush2.bf16.msra.mxu0 0
    %110 = vmatprep.subr.bf16.mxu0 0
    %111 = vmatpush2.bf16.msra.mxu0 0
    %112 = vmatprep.subr.bf16.mxu0 0
    %113 = vmatpush2.bf16.msra.mxu0 0
    %114 = vmatprep.subr.bf16.mxu0 0
    %115 = vmatpush2.bf16.msra.mxu0 0
    %116 = vmatprep.mubr.bf16.mxu0 0
    %117 = vmatmul.mubr.bf16.gmra.mxu0 %v82
    %v118 = vpop.f32.mrf.mxu0
    %v119 = vadd.f32 %v66, %v118
    %v120 = vpop.f32.mrf.mxu0
    %v121 = vpop.f32.mrf.mxu0
    %v122 = vpop.f32.mrf.mxu0
    %123 = vdwg.mxu0
    %v124 = vmax.f32 %v119, 0.0
    %v125 = vpack.c.bf16 %v124, %v124
    %v126 = vld [vmem:[#allocation2] sm:$0xf]
    %v127 = vld [vmem:[#allocation2 + $0x4] sm:$0xf]
    %v128 = vld [vmem:[#allocation2 + $0x8] sm:$0xf]
    %v129 = vld [vmem:[#allocation2 + $0xc] sm:$0xf]
    %v130 = vld [vmem:[#allocation2 + $0x10] sm:$0xf]
    %v131 = vld [vmem:[#allocation2 + $0x14] sm:$0xf]
    %v132 = vld [vmem:[#allocation2 + $0x18] sm:$0xf]
    %v133 = vld [vmem:[#allocation2 + $0x1c] sm:$0xf]
    %v134 = vld [vmem:[#allocation2 + $0x20] sm:$0xf]
    %v135 = vld [vmem:[#allocation2 + $0x24] sm:$0xf]
    %v136 = vld [vmem:[#allocation2 + $0x28] sm:$0xf]
    %v137 = vld [vmem:[#allocation2 + $0x2c] sm:$0xf]
    %v138 = vld [vmem:[#allocation2 + $0x30] sm:$0xf]
    %v139 = vld [vmem:[#allocation2 + $0x34] sm:$0xf]
    %v140 = vld [vmem:[#allocation2 + $0x38] sm:$0xf]
    %v141 = vld [vmem:[#allocation2 + $0x3c] sm:$0xf]
    %v142 = vld [vmem:[%s4] sm:$0x1]
    %v144 = vlaneseq
    %v145 = vshrl.u32 %v144, 7
    %v146 = vsub.s32 0, %v145
    %v147 = vrot.slane %v142, %v146
    %v165 = vunpack.c.l.b16 %v126
    %v166 = vunpack.c.l.b16 %v127
    %v167 = vunpack.c.l.b16 %v128
    %v168 = vunpack.c.l.b16 %v129
    %v169 = vunpack.c.l.b16 %v130
    %v170 = vunpack.c.l.b16 %v131
    %v171 = vunpack.c.l.b16 %v132
    %v172 = vunpack.c.l.b16 %v133
    %v173 = vunpack.c.l.b16 %v134
    %v174 = vunpack.c.l.b16 %v135
    %v175 = vunpack.c.l.b16 %v136
    %v176 = vunpack.c.l.b16 %v137
    %v177 = vunpack.c.l.b16 %v138
    %v178 = vunpack.c.l.b16 %v139
    %v179 = vunpack.c.l.b16 %v140
    %v180 = vunpack.c.l.b16 %v141
    %v181 = vpack.c.b16 %v166, %v165
    %v182 = vpack.c.b16 %v168, %v167
    %v183 = vpack.c.b16 %v170, %v169
    %v184 = vpack.c.b16 %v172, %v171
    %v185 = vpack.c.b16 %v174, %v173
    %v186 = vpack.c.b16 %v176, %v175
    %v187 = vpack.c.b16 %v178, %v177
    %v188 = vpack.c.b16 %v180, %v179
    %197 = vmatprep.subr.bf16.mxu0 0
    %198 = vmatpush1.bf16.msra.mxu0 %v188
    %199 = vmatprep.subr.bf16.mxu0 0
    %200 = vmatpush1.bf16.msra.mxu0 %v187
    %201 = vmatprep.subr.bf16.mxu0 0
    %202 = vmatpush1.bf16.msra.mxu0 %v186
    %203 = vmatprep.subr.bf16.mxu0 0
    %204 = vmatpush1.bf16.msra.mxu0 %v185
    %205 = vmatprep.subr.bf16.mxu0 0
    %206 = vmatpush1.bf16.msra.mxu0 %v184
    %207 = vmatprep.subr.bf16.mxu0 0
    %208 = vmatpush1.bf16.msra.mxu0 %v183
    %209 = vmatprep.subr.bf16.mxu0 0
    %210 = vmatpush1.bf16.msra.mxu0 %v182
    %211 = vmatprep.subr.bf16.mxu0 0
    %212 = vmatpush1.bf16.msra.mxu0 %v181
    %213 = vmatprep.subr.bf16.mxu0 0
    %214 = vmatpush2.bf16.msra.mxu0 0
    %215 = vmatprep.subr.bf16.mxu0 0
    %216 = vmatpush2.bf16.msra.mxu0 0
    %217 = vmatprep.subr.bf16.mxu0 0
    %218 = vmatpush2.bf16.msra.mxu0 0
    %219 = vmatprep.subr.bf16.mxu0 0
    %220 = vmatpush2.bf16.msra.mxu0 0
    %221 = vmatprep.subr.bf16.mxu0 0
    %222 = vmatpush2.bf16.msra.mxu0 0
    %223 = vmatprep.subr.bf16.mxu0 0
    %224 = vmatpush2.bf16.msra.mxu0 0
    %225 = vmatprep.subr.bf16.mxu0 0
    %226 = vmatpush2.bf16.msra.mxu0 0
    %227 = vmatprep.subr.bf16.mxu0 0
    %228 = vmatpush2.bf16.msra.mxu0 0
    %229 = vmatprep.mubr.bf16.mxu0 0
    %230 = vmatmul.mubr.bf16.gmra.mxu0 %v125
    %v231 = vpop.f32.mrf.mxu0
    %v232 = vadd.f32 %v147, %v231
    %v233 = vpop.f32.mrf.mxu0
    %v234 = vpop.f32.mrf.mxu0
    %v235 = vpop.f32.mrf.mxu0
    %236 = vdwg.mxu0
    %v237 = vmax.f32 %v232, 0.0
    %v238 = vpack.c.bf16 %v237, %v237
    %v239 = vld [vmem:[#allocation5] sm:$0xf]
    %v240 = vld [vmem:[#allocation5 + $0x4] sm:$0xf]
    %v241 = vld [vmem:[#allocation5 + $0x8] sm:$0xf]
    %v242 = vld [vmem:[#allocation5 + $0xc] sm:$0xf]
    %v243 = vld [vmem:[#allocation5 + $0x10] sm:$0xf]
    %v244 = vld [vmem:[#allocation5 + $0x14] sm:$0xf]
    %v245 = vld [vmem:[#allocation5 + $0x18] sm:$0xf]
    %v246 = vld [vmem:[#allocation5 + $0x1c] sm:$0xf]
    %v247 = vld [vmem:[#allocation5 + $0x20] sm:$0xf]
    %v248 = vld [vmem:[#allocation5 + $0x24] sm:$0xf]
    %v249 = vld [vmem:[#allocation5 + $0x28] sm:$0xf]
    %v250 = vld [vmem:[#allocation5 + $0x2c] sm:$0xf]
    %v251 = vld [vmem:[#allocation5 + $0x30] sm:$0xf]
    %v252 = vld [vmem:[#allocation5 + $0x34] sm:$0xf]
    %v253 = vld [vmem:[#allocation5 + $0x38] sm:$0xf]
    %v254 = vld [vmem:[#allocation5 + $0x3c] sm:$0xf]
    %v255 = vld [vmem:[%s6] sm:$0x1]
    %v257 = vlaneseq
    %v258 = vshrl.u32 %v257, 7
    %v259 = vsub.s32 0, %v258
    %v260 = vrot.slane %v255, %v259
    %v278 = vunpack.c.l.b16 %v239
    %v279 = vunpack.c.l.b16 %v240
    %v280 = vunpack.c.l.b16 %v241
    %v281 = vunpack.c.l.b16 %v242
    %v282 = vunpack.c.l.b16 %v243
    %v283 = vunpack.c.l.b16 %v244
    %v284 = vunpack.c.l.b16 %v245
    %v285 = vunpack.c.l.b16 %v246
    %v286 = vunpack.c.l.b16 %v247
    %v287 = vunpack.c.l.b16 %v248
    %v288 = vunpack.c.l.b16 %v249
    %v289 = vunpack.c.l.b16 %v250
    %v290 = vunpack.c.l.b16 %v251
    %v291 = vunpack.c.l.b16 %v252
    %v292 = vunpack.c.l.b16 %v253
    %v293 = vunpack.c.l.b16 %v254
    %v294 = vpack.c.b16 %v279, %v278
    %v295 = vpack.c.b16 %v281, %v280
    %v296 = vpack.c.b16 %v283, %v282
    %v297 = vpack.c.b16 %v285, %v284
    %v298 = vpack.c.b16 %v287, %v286
    %v299 = vpack.c.b16 %v289, %v288
    %v300 = vpack.c.b16 %v291, %v290
    %v301 = vpack.c.b16 %v293, %v292
    %310 = vmatprep.subr.bf16.mxu0 0
    %311 = vmatpush1.bf16.msra.mxu0 %v301
    %312 = vmatprep.subr.bf16.mxu0 0
    %313 = vmatpush1.bf16.msra.mxu0 %v300
    %314 = vmatprep.subr.bf16.mxu0 0
    %315 = vmatpush1.bf16.msra.mxu0 %v299
    %316 = vmatprep.subr.bf16.mxu0 0
    %317 = vmatpush1.bf16.msra.mxu0 %v298
    %318 = vmatprep.subr.bf16.mxu0 0
    %319 = vmatpush1.bf16.msra.mxu0 %v297
    %320 = vmatprep.subr.bf16.mxu0 0
    %321 = vmatpush1.bf16.msra.mxu0 %v296
    %322 = vmatprep.subr.bf16.mxu0 0
    %323 = vmatpush1.bf16.msra.mxu0 %v295
    %324 = vmatprep.subr.bf16.mxu0 0
    %325 = vmatpush1.bf16.msra.mxu0 %v294
    %326 = vmatprep.subr.bf16.mxu0 0
    %327 = vmatpush2.bf16.msra.mxu0 0
    %328 = vmatprep.subr.bf16.mxu0 0
    %329 = vmatpush2.bf16.msra.mxu0 0
    %330 = vmatprep.subr.bf16.mxu0 0
    %331 = vmatpush2.bf16.msra.mxu0 0
    %332 = vmatprep.subr.bf16.mxu0 0
    %333 = vmatpush2.bf16.msra.mxu0 0
    %334 = vmatprep.subr.bf16.mxu0 0
    %335 = vmatpush2.bf16.msra.mxu0 0
    %336 = vmatprep.subr.bf16.mxu0 0
    %337 = vmatpush2.bf16.msra.mxu0 0
    %338 = vmatprep.subr.bf16.mxu0 0
    %339 = vmatpush2.bf16.msra.mxu0 0
    %340 = vmatprep.subr.bf16.mxu0 0
    %341 = vmatpush2.bf16.msra.mxu0 0
    %342 = vmatprep.mubr.bf16.mxu0 0
    %343 = vmatmul.mubr.bf16.gmra.mxu0 %v238
    %v344 = vpop.f32.mrf.mxu0
    %v345 = vadd.f32 %v260, %v344
    %v346 = vpop.f32.mrf.mxu0
    %v347 = vpop.f32.mrf.mxu0
    %v348 = vpop.f32.mrf.mxu0
    %349 = vdwg.mxu0
    %350 = vst [vmem:[#allocation7] sm:$0xff] %v345
    // Predicated region
    $region38: #{action_decoder_forward.1} parent=1 // pred_check
      _
    $region39: #{action_decoder_forward.1} parent=1 // pred_check_branch
      %352 = sbr.rel (0) target = $region41
    $region40: #{action_decoder_forward.1} parent=1 // pred_region
      %s354 = ssub.s32 128, 128
      %355 = vsyncadd [#allocation4], %s354
      %s357 = sshll.u32 [#allocation7], 4
      %s358 = int_to_ptr.vmem [resolvable:$true] %s357
      %360 = dma.vmem_to_hbm [thread:$0]  %s358, 128, %s7, [#allocation4]
    $region41: #{action_decoder_forward.1} parent=1 // pred_fallthru
      _
    // Predicated region
    $region42: #{action_decoder_forward.1} parent=1 // pred_check
      _
    $region43: #{action_decoder_forward.1} parent=1 // pred_check_branch
      %362 = sbr.rel (0) target = $region45
    $region44: #{action_decoder_forward.1} parent=1 // pred_region
      %363 = dma.done [#allocation4], 128
    $region45: #{action_decoder_forward.1} parent=1 // pred_fallthru
      _
    %364 = vsyncpa [#allocation3], 1
    %365 = vsyncpa [#allocation6], 1
    %366 = vsyncpa [#allocation4], 1

</llo_original>
